<compile_context>
chip_gen: v5e
topology: v5e:2x2
jax: 0.10.0
libtpu: 0.0.40
codegen_flags: <defaults>
</compile_context>

<pallas_src>
import functools

import jax
import jax.numpy as jnp
from jax.experimental import pallas as pl
from jax.experimental.pallas import tpu as pltpu

_PRIMES = [31, 43, 59, 61, 73, 97, 103, 113, 137, 149, 157, 173, 181, 193, 211, 223]


def _embeddings_kernel(ids_ref, tt_ref, w_ref, pos_ref, g_ref, b_ref, out_ref, *,
                       num_hashes, num_buckets, type_offset, eps):
    T = ids_ref.shape[0]
    C = w_ref.shape[0]
    ids = ids_ref[...].astype(jnp.int32)          # (T, 1) codepoints
    tt = tt_ref[...].astype(jnp.int32)            # (T, 1) token types

    # Build the multi-hot selector [T, C]: one hit per hash table (offset by
    # i*num_buckets) plus one hit in the token-type rows (offset by type_offset).
    col = jax.lax.broadcasted_iota(jnp.int32, (T, C), 1)
    onehot = jnp.zeros((T, C), jnp.float32)
    pow2 = (num_buckets & (num_buckets - 1)) == 0            # python-static
    for i in range(num_hashes):                              # static unroll (<= 16)
        h = (ids + 1) * _PRIMES[i]
        h = (h & (num_buckets - 1)) if pow2 else (h % num_buckets)
        onehot = onehot + (col == (h + i * num_buckets)).astype(jnp.float32)
    onehot = onehot + (col == (tt + type_offset)).astype(jnp.float32)

    # One MXU matmul == hash-shard concat gather + token-type embedding lookup.
    emb = jnp.dot(onehot, w_ref[...], preferred_element_type=jnp.float32)
    x = emb + pos_ref[...].astype(jnp.float32)               # absolute position tile

    # LayerNorm over the hidden axis (f32).
    mean = jnp.mean(x, axis=-1, keepdims=True)
    var = jnp.mean((x - mean) ** 2, axis=-1, keepdims=True)
    y = (x - mean) * jax.lax.rsqrt(var + eps)
    out_ref[...] = (y * g_ref[...] + b_ref[...]).astype(out_ref.dtype)


def canine_embeddings(input_ids, token_type_ids, hash_tables, pos_table, type_table,
                      ln_gamma, ln_beta, *, num_buckets, eps=1e-12, token_tile=128):
    """input_ids / token_type_ids: [B, S] int32
       hash_tables: [num_hashes, num_buckets, H // num_hashes]
       pos_table:   [max_position_embeddings, H]
       type_table:  [type_vocab_size, H]
       ln_gamma / ln_beta: [H]"""
    B, S = input_ids.shape
    num_hashes, nb, shard = hash_tables.shape
    assert nb == num_buckets
    H = num_hashes * shard
    type_vocab = type_table.shape[0]
    N = B * S

    # Token tile: multiple of 8 sublanes and a divisor of S so a tile never straddles a
    # batch row and maps to one contiguous position-table block.
    assert S % 8 == 0, "sequence length must be a multiple of 8"
    T = min(token_tile, S)
    T -= T % 8
    while S % T:
        T -= 8

    # One-time parameter packing (NOT an activation concat): place each hash shard
    # table in its own H-column slice and stack the token-type table below it.
    w_hash = jnp.zeros((num_hashes, nb, H), dtype=jnp.float32)
    for i in range(num_hashes):
        w_hash = w_hash.at[i, :, i * shard:(i + 1) * shard].set(
            hash_tables[i].astype(jnp.float32))
    w_all = jnp.concatenate(
        [w_hash.reshape(num_hashes * nb, H), type_table.astype(jnp.float32)], axis=0)
    C = num_hashes * nb + type_vocab

    ids_flat = input_ids.reshape(N, 1).astype(jnp.int32)      # zero-copy reshape
    tt_flat = token_type_ids.reshape(N, 1).astype(jnp.int32)
    gamma = ln_gamma.reshape(1, H).astype(jnp.float32)
    beta = ln_beta.reshape(1, H).astype(jnp.float32)

    s_blocks = S // T
    kernel = functools.partial(_embeddings_kernel, num_hashes=num_hashes,
                               num_buckets=nb, type_offset=num_hashes * nb, eps=eps)
    out = pl.pallas_call(
        kernel,
        out_shape=jax.ShapeDtypeStruct((N, H), jnp.float32),
        grid=(N // T,),
        in_specs=[
            pl.BlockSpec((T, 1), lambda j: (j, 0)),              # token ids tile
            pl.BlockSpec((T, 1), lambda j: (j, 0)),              # token-type ids tile
            pl.BlockSpec((C, H), lambda j: (0, 0)),              # packed gather weight (resident)
            pl.BlockSpec((T, H), lambda j: (j % s_blocks, 0)),   # position-embedding tile (no gather)
            pl.BlockSpec((1, H), lambda j: (0, 0)),              # LayerNorm gamma
            pl.BlockSpec((1, H), lambda j: (0, 0)),              # LayerNorm beta
        ],
        out_specs=pl.BlockSpec((T, H), lambda j: (j, 0)),        # lane-dense output block
        compiler_params=pltpu.CompilerParams(dimension_semantics=("parallel",)),
    )(ids_flat, tt_flat, w_all, pos_table.astype(jnp.float32), gamma, beta)
    return out.reshape(B, S, H)


def _reference(input_ids, token_type_ids, hash_tables, pos_table, type_table,
               ln_gamma, ln_beta, *, num_buckets, eps=1e-12):
    """Pure-JAX reference mirroring the PyTorch CanineEmbeddings forward (eval)."""
    num_hashes = hash_tables.shape[0]
    shards = []
    for i in range(num_hashes):
        hashed = (input_ids + 1) * _PRIMES[i] % num_buckets
        shards.append(hash_tables[i][hashed])
    x = jnp.concatenate(shards, axis=-1)
    x = x + type_table[token_type_ids]
    S = input_ids.shape[1]
    x = x + pos_table[jnp.arange(S)][None]
    mean = x.mean(-1, keepdims=True)
    var = ((x - mean) ** 2).mean(-1, keepdims=True)
    return (x - mean) * jax.lax.rsqrt(var + eps) * ln_gamma + ln_beta


if __name__ == "__main__":
    B, S = 2, 16
    num_hashes, num_buckets, type_vocab, max_pos = 4, 64, 16, 64
    H = 128                                   # lane-dense hidden size (multiple of 128)
    shard = H // num_hashes

    key = jax.random.PRNGKey(0)
    k_ids, k_tt, k_hash, k_pos, k_type, k_g, k_b = jax.random.split(key, 7)

    input_ids = jax.random.randint(k_ids, (B, S), 0, 1000, dtype=jnp.int32)
    token_type_ids = jax.random.randint(k_tt, (B, S), 0, type_vocab, dtype=jnp.int32)
    hash_tables = 0.02 * jax.random.normal(k_hash, (num_hashes, num_buckets, shard),
                                           dtype=jnp.float32)
    pos_table = 0.02 * jax.random.normal(k_pos, (max_pos, H), dtype=jnp.float32)
    type_table = 0.02 * jax.random.normal(k_type, (type_vocab, H), dtype=jnp.float32)
    ln_gamma = 1.0 + 0.1 * jax.random.normal(k_g, (H,), dtype=jnp.float32)
    ln_beta = 0.1 * jax.random.normal(k_b, (H,), dtype=jnp.float32)

    out = canine_embeddings(input_ids, token_type_ids, hash_tables, pos_table,
                            type_table, ln_gamma, ln_beta,
                            num_buckets=num_buckets, token_tile=8)
    out = jax.block_until_ready(out)

    ref = _reference(input_ids, token_type_ids, hash_tables, pos_table, type_table,
                     ln_gamma, ln_beta, num_buckets=num_buckets)
    assert out.shape == (B, S, H)
    assert jnp.allclose(out, ref, rtol=1e-5, atol=1e-5), "mismatch vs JAX reference"
    print("KERNEL_OK")
</pallas_src>

<mosaic_0001>
module attributes {stable_mosaic.version = 11 : i64} {
  func.func @_embeddings_kernel(%arg0: i32, %arg1: memref<8x1xi32, #tpu.memory_space<vmem>>, %arg2: memref<8x1xi32, #tpu.memory_space<vmem>>, %arg3: memref<272x128xf32, #tpu.memory_space<vmem>>, %arg4: memref<8x128xf32, #tpu.memory_space<vmem>>, %arg5: memref<1x128xf32, #tpu.memory_space<vmem>>, %arg6: memref<1x128xf32, #tpu.memory_space<vmem>>, %arg7: memref<8x128xf32, #tpu.memory_space<vmem>>) attributes {dimension_semantics = [#tpu.dimension_semantics<parallel>], iteration_bounds = array<i64: 4>, scalar_prefetch = 0 : i64, scratch_operands = 0 : i64, tpu.core_type = #tpu.core_type<tc>, window_params = [{transform_indices = @transform_0, window_bounds = array<i64: 8, 1>}, {transform_indices = @transform_1, window_bounds = array<i64: 8, 1>}, {pipeline_mode = #tpu.pipeline_mode<synchronous>, transform_indices = @transform_2, window_bounds = array<i64: 272, 128>}, {transform_indices = @transform_3, window_bounds = array<i64: 8, 128>}, {pipeline_mode = #tpu.pipeline_mode<synchronous>, transform_indices = @transform_4, window_bounds = array<i64: 1, 128>}, {pipeline_mode = #tpu.pipeline_mode<synchronous>, transform_indices = @transform_5, window_bounds = array<i64: 1, 128>}, {transform_indices = @transform_6, window_bounds = array<i64: 8, 128>}]} {
    %c0 = arith.constant 0 : index
    %c0_0 = arith.constant 0 : index
    %0 = vector.load %arg1[%c0, %c0_0] : memref<8x1xi32, #tpu.memory_space<vmem>>, vector<8x1xi32>
    %c0_1 = arith.constant 0 : index
    %c0_2 = arith.constant 0 : index
    %1 = vector.load %arg2[%c0_1, %c0_2] : memref<8x1xi32, #tpu.memory_space<vmem>>, vector<8x1xi32>
    %2 = tpu.iota {dimensions = array<i32: 1>} : vector<8x272xi32>
    %cst = arith.constant 0.000000e+00 : f32
    %3 = vector.broadcast %cst : f32 to vector<8x272xf32>
    %c1_i32 = arith.constant 1 : i32
    %4 = vector.broadcast %c1_i32 : i32 to vector<8x1xi32>
    %5 = arith.addi %0, %4 : vector<8x1xi32>
    %c31_i32 = arith.constant 31 : i32
    %6 = vector.broadcast %c31_i32 : i32 to vector<8x1xi32>
    %7 = arith.muli %5, %6 : vector<8x1xi32>
    %c63_i32 = arith.constant 63 : i32
    %8 = vector.broadcast %c63_i32 : i32 to vector<8x1xi32>
    %9 = arith.andi %7, %8 : vector<8x1xi32>
    %c0_i32 = arith.constant 0 : i32
    %10 = vector.broadcast %c0_i32 : i32 to vector<8x1xi32>
    %11 = arith.addi %9, %10 : vector<8x1xi32>
    %12 = vector.broadcast %11 : vector<8x1xi32> to vector<8x272xi32>
    %13 = arith.cmpi eq, %2, %12 : vector<8x272xi32>
    %14 = arith.extui %13 : vector<8x272xi1> to vector<8x272xi32>
    %15 = arith.sitofp %14 : vector<8x272xi32> to vector<8x272xf32>
    %16 = arith.addf %3, %15 : vector<8x272xf32>
    %c1_i32_3 = arith.constant 1 : i32
    %17 = vector.broadcast %c1_i32_3 : i32 to vector<8x1xi32>
    %18 = arith.addi %0, %17 : vector<8x1xi32>
    %c43_i32 = arith.constant 43 : i32
    %19 = vector.broadcast %c43_i32 : i32 to vector<8x1xi32>
    %20 = arith.muli %18, %19 : vector<8x1xi32>
    %c63_i32_4 = arith.constant 63 : i32
    %21 = vector.broadcast %c63_i32_4 : i32 to vector<8x1xi32>
    %22 = arith.andi %20, %21 : vector<8x1xi32>
    %c64_i32 = arith.constant 64 : i32
    %23 = vector.broadcast %c64_i32 : i32 to vector<8x1xi32>
    %24 = arith.addi %22, %23 : vector<8x1xi32>
    %25 = vector.broadcast %24 : vector<8x1xi32> to vector<8x272xi32>
    %26 = arith.cmpi eq, %2, %25 : vector<8x272xi32>
    %27 = arith.extui %26 : vector<8x272xi1> to vector<8x272xi32>
    %28 = arith.sitofp %27 : vector<8x272xi32> to vector<8x272xf32>
    %29 = arith.addf %16, %28 : vector<8x272xf32>
    %c1_i32_5 = arith.constant 1 : i32
    %30 = vector.broadcast %c1_i32_5 : i32 to vector<8x1xi32>
    %31 = arith.addi %0, %30 : vector<8x1xi32>
    %c59_i32 = arith.constant 59 : i32
    %32 = vector.broadcast %c59_i32 : i32 to vector<8x1xi32>
    %33 = arith.muli %31, %32 : vector<8x1xi32>
    %c63_i32_6 = arith.constant 63 : i32
    %34 = vector.broadcast %c63_i32_6 : i32 to vector<8x1xi32>
    %35 = arith.andi %33, %34 : vector<8x1xi32>
    %c128_i32 = arith.constant 128 : i32
    %36 = vector.broadcast %c128_i32 : i32 to vector<8x1xi32>
    %37 = arith.addi %35, %36 : vector<8x1xi32>
    %38 = vector.broadcast %37 : vector<8x1xi32> to vector<8x272xi32>
    %39 = arith.cmpi eq, %2, %38 : vector<8x272xi32>
    %40 = arith.extui %39 : vector<8x272xi1> to vector<8x272xi32>
    %41 = arith.sitofp %40 : vector<8x272xi32> to vector<8x272xf32>
    %42 = arith.addf %29, %41 : vector<8x272xf32>
    %c1_i32_7 = arith.constant 1 : i32
    %43 = vector.broadcast %c1_i32_7 : i32 to vector<8x1xi32>
    %44 = arith.addi %0, %43 : vector<8x1xi32>
    %c61_i32 = arith.constant 61 : i32
    %45 = vector.broadcast %c61_i32 : i32 to vector<8x1xi32>
    %46 = arith.muli %44, %45 : vector<8x1xi32>
    %c63_i32_8 = arith.constant 63 : i32
    %47 = vector.broadcast %c63_i32_8 : i32 to vector<8x1xi32>
    %48 = arith.andi %46, %47 : vector<8x1xi32>
    %c192_i32 = arith.constant 192 : i32
    %49 = vector.broadcast %c192_i32 : i32 to vector<8x1xi32>
    %50 = arith.addi %48, %49 : vector<8x1xi32>
    %51 = vector.broadcast %50 : vector<8x1xi32> to vector<8x272xi32>
    %52 = arith.cmpi eq, %2, %51 : vector<8x272xi32>
    %53 = arith.extui %52 : vector<8x272xi1> to vector<8x272xi32>
    %54 = arith.sitofp %53 : vector<8x272xi32> to vector<8x272xf32>
    %55 = arith.addf %42, %54 : vector<8x272xf32>
    %c256_i32 = arith.constant 256 : i32
    %56 = vector.broadcast %c256_i32 : i32 to vector<8x1xi32>
    %57 = arith.addi %1, %56 : vector<8x1xi32>
    %58 = vector.broadcast %57 : vector<8x1xi32> to vector<8x272xi32>
    %59 = arith.cmpi eq, %2, %58 : vector<8x272xi32>
    %60 = arith.extui %59 : vector<8x272xi1> to vector<8x272xi32>
    %61 = arith.sitofp %60 : vector<8x272xi32> to vector<8x272xf32>
    %62 = arith.addf %55, %61 : vector<8x272xf32>
    %c0_9 = arith.constant 0 : index
    %c0_10 = arith.constant 0 : index
    %63 = vector.load %arg3[%c0_9, %c0_10] : memref<272x128xf32, #tpu.memory_space<vmem>>, vector<272x128xf32>
    %cst_11 = arith.constant dense<0.000000e+00> : vector<8x128xf32>
    %64 = tpu.matmul %62, %63, %cst_11 {dimension_numbers = #tpu.dot_dimension_numbers<[1], [0], [0], [1], [0, 0, 1, 1], [], []>} : vector<8x272xf32>, vector<272x128xf32>, vector<8x128xf32> -> vector<8x128xf32>
    %c0_12 = arith.constant 0 : index
    %c0_13 = arith.constant 0 : index
    %65 = vector.load %arg4[%c0_12, %c0_13] : memref<8x128xf32, #tpu.memory_space<vmem>>, vector<8x128xf32>
    %66 = arith.addf %64, %65 : vector<8x128xf32>
    %cst_14 = arith.constant dense<0.000000e+00> : vector<8xf32>
    %67 = vector.multi_reduction <add>, %66, %cst_14 [1] : vector<8x128xf32> to vector<8xf32>
    %68 = vector.shape_cast %67 : vector<8xf32> to vector<8x1xf32>
    %cst_15 = arith.constant 1.280000e+02 : f32
    %69 = vector.broadcast %cst_15 : f32 to vector<8x1xf32>
    %70 = arith.divf %68, %69 : vector<8x1xf32>
    %71 = vector.broadcast %70 : vector<8x1xf32> to vector<8x128xf32>
    %72 = arith.subf %66, %71 : vector<8x128xf32>
    %73 = arith.mulf %72, %72 : vector<8x128xf32>
    %cst_16 = arith.constant dense<0.000000e+00> : vector<8xf32>
    %74 = vector.multi_reduction <add>, %73, %cst_16 [1] : vector<8x128xf32> to vector<8xf32>
    %75 = vector.shape_cast %74 : vector<8xf32> to vector<8x1xf32>
    %cst_17 = arith.constant 1.280000e+02 : f32
    %76 = vector.broadcast %cst_17 : f32 to vector<8x1xf32>
    %77 = arith.divf %75, %76 : vector<8x1xf32>
    %78 = vector.broadcast %70 : vector<8x1xf32> to vector<8x128xf32>
    %79 = arith.subf %66, %78 : vector<8x128xf32>
    %cst_18 = arith.constant 9.99999996E-13 : f32
    %80 = vector.broadcast %cst_18 : f32 to vector<8x1xf32>
    %81 = arith.addf %77, %80 : vector<8x1xf32>
    %82 = math.rsqrt %81 : vector<8x1xf32>
    %83 = vector.broadcast %82 : vector<8x1xf32> to vector<8x128xf32>
    %84 = arith.mulf %79, %83 : vector<8x128xf32>
    %c0_19 = arith.constant 0 : index
    %c0_20 = arith.constant 0 : index
    %85 = vector.load %arg5[%c0_19, %c0_20] : memref<1x128xf32, #tpu.memory_space<vmem>>, vector<1x128xf32>
    %86 = vector.broadcast %85 : vector<1x128xf32> to vector<8x128xf32>
    %87 = arith.mulf %84, %86 : vector<8x128xf32>
    %c0_21 = arith.constant 0 : index
    %c0_22 = arith.constant 0 : index
    %88 = vector.load %arg6[%c0_21, %c0_22] : memref<1x128xf32, #tpu.memory_space<vmem>>, vector<1x128xf32>
    %89 = vector.broadcast %88 : vector<1x128xf32> to vector<8x128xf32>
    %90 = arith.addf %87, %89 : vector<8x128xf32>
    %c0_23 = arith.constant 0 : index
    %c0_24 = arith.constant 0 : index
    %91 = vector.load %arg7[%c0_23, %c0_24] : memref<8x128xf32, #tpu.memory_space<vmem>>, vector<8x128xf32>
    tpu.vector_store %arg7[%c0_23, %c0_24], %90 {strides = array<i32>} : memref<8x128xf32, #tpu.memory_space<vmem>>, vector<8x128xf32>,
    return
  }
  func.func @transform_0(%arg0: i32) -> (i32, i32) {
    %c0_i32 = arith.constant 0 : i32
    %c0_i32_0 = arith.constant 0 : i32
    return %arg0, %c0_i32 : i32, i32
  }
  func.func @transform_1(%arg0: i32) -> (i32, i32) {
    %c0_i32 = arith.constant 0 : i32
    %c0_i32_0 = arith.constant 0 : i32
    return %arg0, %c0_i32 : i32, i32
  }
  func.func @transform_2(%arg0: i32) -> (i32, i32) {
    %c0_i32 = arith.constant 0 : i32
    %c0_i32_0 = arith.constant 0 : i32
    %c0_i32_1 = arith.constant 0 : i32
    return %c0_i32, %c0_i32_0 : i32, i32
  }
  func.func @transform_3(%arg0: i32) -> (i32, i32) {
    %c2_i32 = arith.constant 2 : i32
    %c0_i32 = arith.constant 0 : i32
    %0 = arith.cmpi eq, %c2_i32, %c0_i32 : i32
    %c1_i32 = arith.constant 1 : i32
    %1 = arith.select %0, %c1_i32, %c2_i32 : i32
    %2 = arith.remsi %arg0, %1 : i32
    %c0_i32_0 = arith.constant 0 : i32
    %3 = arith.cmpi ne, %2, %c0_i32_0 : i32
    %c0_i32_1 = arith.constant 0 : i32
    %4 = arith.cmpi slt, %2, %c0_i32_1 : i32
    %c0_i32_2 = arith.constant 0 : i32
    %5 = arith.cmpi slt, %1, %c0_i32_2 : i32
    %6 = arith.xori %4, %5 : i1
    %7 = arith.andi %6, %3 : i1
    %8 = arith.addi %2, %1 : i32
    %9 = arith.select %7, %8, %2 : i32
    %c0_i32_3 = arith.constant 0 : i32
    %c0_i32_4 = arith.constant 0 : i32
    return %9, %c0_i32_3 : i32, i32
  }
  func.func @transform_4(%arg0: i32) -> (i32, i32) {
    %c0_i32 = arith.constant 0 : i32
    %c0_i32_0 = arith.constant 0 : i32
    %c0_i32_1 = arith.constant 0 : i32
    return %c0_i32, %c0_i32_0 : i32, i32
  }
  func.func @transform_5(%arg0: i32) -> (i32, i32) {
    %c0_i32 = arith.constant 0 : i32
    %c0_i32_0 = arith.constant 0 : i32
    %c0_i32_1 = arith.constant 0 : i32
    return %c0_i32, %c0_i32_0 : i32, i32
  }
  func.func @transform_6(%arg0: i32) -> (i32, i32) {
    %c0_i32 = arith.constant 0 : i32
    %c0_i32_0 = arith.constant 0 : i32
    return %arg0, %c0_i32 : i32, i32
  }
}

</mosaic_0001>

<llo_original>
// kernel: tpu_custom_call.1
$region0: #{tpu_custom_call.1}
  #allocation0 [shape = 'u32[]', space=smem, size = 0x4, offset = 0x4, fixed_abs, tag = 'smem constant byte address 0x4 - core index']
  #allocation1 [shape = 'u32[72,128]{1,0:T(1,128)}', space=vmem, size = 0x9000, scoped, tag = 'internal scratch']
  %s0 = inlined_call_operand.vmem [shape: s32[32,1], index: 0, kind: input, shape index: {}]
  %s1 = inlined_call_operand.vmem [shape: s32[32,1], index: 1, kind: input, shape index: {}]
  %s2 = inlined_call_operand.hbm [shape: f32[272,128], index: 2, kind: input, shape index: {}]
  %s3 = inlined_call_operand.vmem [shape: f32[64,128], index: 3, kind: input, shape index: {}]
  %s4 = inlined_call_operand.vmem [shape: f32[1,128], index: 4, kind: input, shape index: {}]
  %s5 = inlined_call_operand.vmem [shape: f32[1,128], index: 5, kind: input, shape index: {}]
  %s6 = inlined_call_operand.hbm [shape: f32[32,128], index: 6, kind: output, shape index: {}]
  %s7 = sld [smem:[#allocation0]]
  $region61: #{tpu_custom_call.1} parent=0
    _
  %s9 = ssub.s32 1, %s7
  %s10 = scalar_select 0, %s9, %s7
  $region1: #{tpu_custom_call.1} parent=0
    #allocation2 [shape = 'u8[139264]{0}', space=vmem, size = 0x22000, scoped, tag = 'input window, operand 2, single buffered']
    #allocation3 [shape = 's32[2]{0}', space=sflag, size = 0x8, scoped, tag = 'scoped memory for tpu_custom_call.1']
    #allocation4 [shape = 's32[2]{0}', space=sflag, size = 0x8, scoped, tag = 'scoped memory for tpu_custom_call.1']
    #allocation5 [shape = 'u8[8192]{0}', space=vmem, size = 0x2000, scoped, tag = 'output window, operand 0']
    %11 = vsyncpa [#allocation3], 0
    %12 = vsyncpa [#allocation4], 0
    %s13 = scalar_lea.sflag [#allocation4], 1
    %14 = vsyncpa %s13, 0
    loop: start=0, step=1, limit=6
    $region2: #{tpu_custom_call.1} parent=1 // loop_pre_header
      _
    $region3: #{tpu_custom_call.1} parent=1 // loop_header
      %s16 = sphi 0, %s20
      %p17 = scmp.ge.s32.totalorder %s16, 6
      %s26 = sphi 0, %s28
      %s29 = sphi 0, %s26
      %s30 = sphi 0, %s29
      %s46 = sphi 0, %s30
      %s52 = sphi 0, %s54
      %s55 = sphi 0, %s52
      %s56 = sphi 0, %s55
      %s72 = sphi 0, %s56
      %s76 = sphi 0, %s76
      %s78 = sphi 0, %s76
      %s79 = sphi 0, %s78
      %s93 = sphi 0, %s79
      %s123 = sphi 0, %s125
      %s126 = sphi 0, %s123
      %s127 = sphi 0, %s126
      %s143 = sphi 0, %s127
      %s147 = sphi 0, %s147
      %s149 = sphi 0, %s147
      %s150 = sphi 0, %s149
      %s164 = sphi 0, %s150
      %s168 = sphi 0, %s168
      %s170 = sphi 0, %s168
      %s171 = sphi 0, %s170
      %s185 = sphi 0, %s171
      %s191 = sphi 0, %s193
      %s194 = sphi 0, %s191
      %s195 = sphi 0, %s194
      %s211 = sphi 0, %s195
    $region4: #{tpu_custom_call.1} parent=1 // loop_header_branch
      %19 = sbr.rel (%p17) target = $region8
    $region5: #{tpu_custom_call.1} parent=1 // loop_body
      %s21 = ssub.s32 %s16, 1
      %s22 = ssub.s32 %s16, 2
      %s23 = sadd.s32 %s16, 1
      %s24 = ssub.s32 %s16, %s23
      %p25 = scmp.eq.s32.totalorder %s24, 0
      %s27 = sadd.s32 %s26, 1
      %s28 = scalar_select %p25, %s26, %s27
      %p31 = pneg %p25
      %p32 = scmp.eq.s32.totalorder %s16, 3
      %p33 = por %p31, %p32
      %p34 = scmp.ne.s32.totalorder %s26, %s29
      %p35 = scmp.eq.s32.totalorder %s16, 0
      %p36 = por %p34, %p35
      %p37 = scmp.ne.s32.totalorder %s26, %s29
      %p38 = scmp.eq.s32.totalorder %s21, 3
      %p39 = por %p37, %p38
      %p40 = scmp.ne.s32.totalorder %s29, %s30
      %p41 = scmp.eq.s32.totalorder %s21, 0
      %p42 = por %p40, %p41
      %p43 = scmp.ne.s32.totalorder %s29, %s30
      %p44 = scmp.eq.s32.totalorder %s22, 3
      %p45 = por %p43, %p44
      %p47 = scmp.ne.s32.totalorder %s30, %s46
      %p48 = scmp.eq.s32.totalorder %s22, 0
      %p49 = por %p47, %p48
      %s50 = ssub.s32 %s16, %s23
      %p51 = scmp.eq.s32.totalorder %s50, 0
      %s53 = sadd.s32 %s52, 1
      %s54 = scalar_select %p51, %s52, %s53
      %p57 = pneg %p51
      %p58 = scmp.eq.s32.totalorder %s16, 3
      %p59 = por %p57, %p58
      %p60 = scmp.ne.s32.totalorder %s52, %s55
      %p61 = scmp.eq.s32.totalorder %s16, 0
      %p62 = por %p60, %p61
      %p63 = scmp.ne.s32.totalorder %s52, %s55
      %p64 = scmp.eq.s32.totalorder %s21, 3
      %p65 = por %p63, %p64
      %p66 = scmp.ne.s32.totalorder %s55, %s56
      %p67 = scmp.eq.s32.totalorder %s21, 0
      %p68 = por %p66, %p67
      %p69 = scmp.ne.s32.totalorder %s55, %s56
      %p70 = scmp.eq.s32.totalorder %s22, 3
      %p71 = por %p69, %p70
      %p73 = scmp.ne.s32.totalorder %s56, %s72
      %p74 = scmp.eq.s32.totalorder %s22, 0
      %p75 = por %p73, %p74
      %s77 = sadd.s32 %s76, 1
      %p80 = scmp.eq.s32.totalorder %s16, 3
      %p81 = scmp.ne.s32.totalorder %s76, %s78
      %p82 = scmp.eq.s32.totalorder %s16, 0
      %p83 = por %p81, %p82
      %p84 = scmp.ne.s32.totalorder %s76, %s78
      %p85 = scmp.eq.s32.totalorder %s21, 3
      %p86 = por %p84, %p85
      %p87 = scmp.ne.s32.totalorder %s78, %s79
      %p88 = scmp.eq.s32.totalorder %s21, 0
      %p89 = por %p87, %p88
      %p90 = scmp.ne.s32.totalorder %s78, %s79
      %p91 = scmp.eq.s32.totalorder %s22, 3
      %p92 = por %p90, %p91
      %p94 = scmp.ne.s32.totalorder %s79, %s93
      %p95 = scmp.eq.s32.totalorder %s22, 0
      %p96 = por %p94, %p95
      %p97 = scmp.lt.s32.totalorder %s16, 0
      %s98 = ssub.s32 0, %s16
      %s99 = scalar_select %p97, %s98, %s16
      %s100 = sand.u32 %s99, 1
      %s101 = ssub.s32 0, %s100
      %s102 = scalar_select %p97, %s101, %s100
      %p103 = scmp.ne.s32.totalorder %s102, 0
      %p104 = scmp.lt.s32.totalorder %s102, 0
      %p105 = pnand %p104, %p103
      %p106 = pneg %p105
      %s107 = sadd.s32 %s102, 2
      %s108 = scalar_select %p106, %s107, %s102
      %p109 = scmp.lt.s32.totalorder %s23, 0
      %s110 = ssub.s32 0, %s23
      %s111 = scalar_select %p109, %s110, %s23
      %s112 = sand.u32 %s111, 1
      %s113 = ssub.s32 0, %s112
      %s114 = scalar_select %p109, %s113, %s112
      %p115 = scmp.ne.s32.totalorder %s114, 0
      %p116 = scmp.lt.s32.totalorder %s114, 0
      %p117 = pnand %p116, %p115
      %p118 = pneg %p117
      %s119 = sadd.s32 %s114, 2
      %s120 = scalar_select %p118, %s119, %s114
      %s121 = ssub.s32 %s108, %s120
      %p122 = scmp.eq.s32.totalorder %s121, 0
      %s124 = sadd.s32 %s123, 1
      %s125 = scalar_select %p122, %s123, %s124
      %p128 = pneg %p122
      %p129 = scmp.eq.s32.totalorder %s16, 3
      %p130 = por %p128, %p129
      %p131 = scmp.ne.s32.totalorder %s123, %s126
      %p132 = scmp.eq.s32.totalorder %s16, 0
      %p133 = por %p131, %p132
      %p134 = scmp.ne.s32.totalorder %s123, %s126
      %p135 = scmp.eq.s32.totalorder %s21, 3
      %p136 = por %p134, %p135
      %p137 = scmp.ne.s32.totalorder %s126, %s127
      %p138 = scmp.eq.s32.totalorder %s21, 0
      %p139 = por %p137, %p138
      %p140 = scmp.ne.s32.totalorder %s126, %s127
      %p141 = scmp.eq.s32.totalorder %s22, 3
      %p142 = por %p140, %p141
      %p144 = scmp.ne.s32.totalorder %s127, %s143
      %p145 = scmp.eq.s32.totalorder %s22, 0
      %p146 = por %p144, %p145
      %s148 = sadd.s32 %s147, 1
      %p151 = scmp.eq.s32.totalorder %s16, 3
      %p152 = scmp.ne.s32.totalorder %s147, %s149
      %p153 = scmp.eq.s32.totalorder %s16, 0
      %p154 = por %p152, %p153
      %p155 = scmp.ne.s32.totalorder %s147, %s149
      %p156 = scmp.eq.s32.totalorder %s21, 3
      %p157 = por %p155, %p156
      %p158 = scmp.ne.s32.totalorder %s149, %s150
      %p159 = scmp.eq.s32.totalorder %s21, 0
      %p160 = por %p158, %p159
      %p161 = scmp.ne.s32.totalorder %s149, %s150
      %p162 = scmp.eq.s32.totalorder %s22, 3
      %p163 = por %p161, %p162
      %p165 = scmp.ne.s32.totalorder %s150, %s164
      %p166 = scmp.eq.s32.totalorder %s22, 0
      %p167 = por %p165, %p166
      %s169 = sadd.s32 %s168, 1
      %p172 = scmp.eq.s32.totalorder %s16, 3
      %p173 = scmp.ne.s32.totalorder %s168, %s170
      %p174 = scmp.eq.s32.totalorder %s16, 0
      %p175 = por %p173, %p174
      %p176 = scmp.ne.s32.totalorder %s168, %s170
      %p177 = scmp.eq.s32.totalorder %s21, 3
      %p178 = por %p176, %p177
      %p179 = scmp.ne.s32.totalorder %s170, %s171
      %p180 = scmp.eq.s32.totalorder %s21, 0
      %p181 = por %p179, %p180
      %p182 = scmp.ne.s32.totalorder %s170, %s171
      %p183 = scmp.eq.s32.totalorder %s22, 3
      %p184 = por %p182, %p183
      %p186 = scmp.ne.s32.totalorder %s171, %s185
      %p187 = scmp.eq.s32.totalorder %s22, 0
      %p188 = por %p186, %p187
      %s189 = ssub.s32 %s16, %s23
      %p190 = scmp.eq.s32.totalorder %s189, 0
      %s192 = sadd.s32 %s191, 1
      %s193 = scalar_select %p190, %s191, %s192
      %p196 = pneg %p190
      %p197 = scmp.eq.s32.totalorder %s16, 3
      %p198 = por %p196, %p197
      %p199 = scmp.ne.s32.totalorder %s191, %s194
      %p200 = scmp.eq.s32.totalorder %s16, 0
      %p201 = por %p199, %p200
      %p202 = scmp.ne.s32.totalorder %s191, %s194
      %p203 = scmp.eq.s32.totalorder %s21, 3
      %p204 = por %p202, %p203
      %p205 = scmp.ne.s32.totalorder %s194, %s195
      %p206 = scmp.eq.s32.totalorder %s21, 0
      %p207 = por %p205, %p206
      %p208 = scmp.ne.s32.totalorder %s194, %s195
      %p209 = scmp.eq.s32.totalorder %s22, 3
      %p210 = por %p208, %p209
      %p212 = scmp.ne.s32.totalorder %s195, %s211
      %p213 = scmp.eq.s32.totalorder %s22, 0
      %p214 = por %p212, %p213
      %p215 = scmp.le.s32.totalorder 1, %s16
      %p216 = scmp.lt.s32.totalorder %s16, 5
      %p217 = pnand %p215, %p216
      %p218 = pneg %p217
      // Predicated region
      $region9: #{tpu_custom_call.1} parent=5 // pred_check
        _
      $region10: #{tpu_custom_call.1} parent=5 // pred_check_branch
        %220 = sbr.rel (%p217) target = $region12
      $region11: #{tpu_custom_call.1} parent=5 // pred_region
        %s221 = ssub.s32 %s16, 1
        // Predicated region
        $region13: #{tpu_custom_call.1} parent=11 // pred_check
          %p222 = pneg %p89
        $region14: #{tpu_custom_call.1} parent=11 // pred_check_branch
          %224 = sbr.rel (%p222) target = $region16
        $region15: #{tpu_custom_call.1} parent=11 // pred_region
          %226 = vsyncadd [#allocation3], 0
          %s227 = sshll.u32 %s2, 4
          %s228 = int_to_ptr.hbm [resolvable:$true] %s227
          %s229 = sshll.u32 [#allocation2], 4
          %s230 = int_to_ptr.vmem [resolvable:$true] %s229
          %235 = dma.hbm_to_vmem [thread:$0]  %s228, 4352, %s230, [#allocation3], 128, 128, 8
        $region16: #{tpu_custom_call.1} parent=11 // pred_fallthru
          _
        // Predicated region
        $region17: #{tpu_custom_call.1} parent=11 // pred_check
          %p236 = pneg %p160
        $region18: #{tpu_custom_call.1} parent=11 // pred_check_branch
          %238 = sbr.rel (%p236) target = $region20
        $region19: #{tpu_custom_call.1} parent=11 // pred_region
          _
        $region20: #{tpu_custom_call.1} parent=11 // pred_fallthru
          _
        // Predicated region
        $region21: #{tpu_custom_call.1} parent=11 // pred_check
          %p239 = pneg %p181
        $region22: #{tpu_custom_call.1} parent=11 // pred_check_branch
          %241 = sbr.rel (%p239) target = $region24
        $region23: #{tpu_custom_call.1} parent=11 // pred_region
          _
        $region24: #{tpu_custom_call.1} parent=11 // pred_fallthru
          _
      $region12: #{tpu_custom_call.1} parent=5 // pred_fallthru
        _
      %p242 = scmp.lt.s32.totalorder %s16, 4
      // Predicated region
      $region25: #{tpu_custom_call.1} parent=5 // pred_check
        %p243 = pneg %p242
      $region26: #{tpu_custom_call.1} parent=5 // pred_check_branch
        %245 = sbr.rel (%p243) target = $region28
      $region27: #{tpu_custom_call.1} parent=5 // pred_region
        // Predicated region
        $region29: #{tpu_custom_call.1} parent=27 // pred_check
          %p246 = pneg %p36
        $region30: #{tpu_custom_call.1} parent=27 // pred_check_branch
          %248 = sbr.rel (%p246) target = $region32
        $region31: #{tpu_custom_call.1} parent=27 // pred_region
          %p249 = scmp.lt.s32.totalorder %s16, 3
          %s250 = scalar_select %p249, %s16, 3
          %s251 = smul.addr %s250, 8
          %s252 = scalar_lea.vmem %s0, %s251
        $region32: #{tpu_custom_call.1} parent=27 // pred_fallthru
          _
        // Predicated region
        $region33: #{tpu_custom_call.1} parent=27 // pred_check
          %p253 = pneg %p62
        $region34: #{tpu_custom_call.1} parent=27 // pred_check_branch
          %255 = sbr.rel (%p253) target = $region36
        $region35: #{tpu_custom_call.1} parent=27 // pred_region
          %p256 = scmp.lt.s32.totalorder %s16, 3
          %s257 = scalar_select %p256, %s16, 3
          %s258 = smul.addr %s257, 8
          %s259 = scalar_lea.vmem %s1, %s258
        $region36: #{tpu_custom_call.1} parent=27 // pred_fallthru
          _
        // Predicated region
        $region37: #{tpu_custom_call.1} parent=27 // pred_check
          %p260 = pneg %p133
        $region38: #{tpu_custom_call.1} parent=27 // pred_check_branch
          %262 = sbr.rel (%p260) target = $region40
        $region39: #{tpu_custom_call.1} parent=27 // pred_region
          %p263 = scmp.lt.s32.totalorder %s16, 0
          %s264 = ssub.s32 0, %s16
          %s265 = scalar_select %p263, %s264, %s16
          %s266 = sand.u32 %s265, 1
          %s267 = ssub.s32 0, %s266
          %s268 = scalar_select %p263, %s267, %s266
          %p269 = scmp.ne.s32.totalorder %s268, 0
          %p270 = scmp.lt.s32.totalorder %s268, 0
          %p271 = pnand %p270, %p269
          %p272 = pneg %p271
          %s273 = sadd.s32 %s268, 2
          %s274 = scalar_select %p272, %s273, %s268
          %p275 = scmp.lt.s32.totalorder %s274, 7
          %s276 = scalar_select %p275, %s274, 7
          %s277 = smul.addr %s276, 8
          %s278 = scalar_lea.vmem %s3, %s277
          %p279 = scmp.lt.s32.totalorder %s16, 0
          %s280 = ssub.s32 0, %s16
          %s281 = scalar_select %p279, %s280, %s16
          %s282 = sand.u32 %s281, 1
          %s283 = ssub.s32 0, %s282
          %s284 = scalar_select %p279, %s283, %s282
          %p285 = scmp.ne.s32.totalorder %s284, 0
          %p286 = scmp.lt.s32.totalorder %s284, 0
          %p287 = pnand %p286, %p285
          %p288 = pneg %p287
          %s289 = sadd.s32 %s284, 2
          %s290 = scalar_select %p288, %s289, %s284
        $region40: #{tpu_custom_call.1} parent=27 // pred_fallthru
          _
      $region28: #{tpu_custom_call.1} parent=5 // pred_fallthru
        _
      %p291 = scmp.le.s32.totalorder 1, %s16
      %p292 = scmp.lt.s32.totalorder %s16, 5
      %p293 = pnand %p291, %p292
      %p294 = pneg %p293
      // Predicated region
      $region41: #{tpu_custom_call.1} parent=5 // pred_check
        _
      $region42: #{tpu_custom_call.1} parent=5 // pred_check_branch
        %296 = sbr.rel (%p293) target = $region44
      $region43: #{tpu_custom_call.1} parent=5 // pred_region
        %s297 = ssub.s32 %s16, 1
        // Predicated region
        $region45: #{tpu_custom_call.1} parent=43 // pred_check
          %p298 = pneg %p89
        $region46: #{tpu_custom_call.1} parent=43 // pred_check_branch
          %300 = sbr.rel (%p298) target = $region48
        $region47: #{tpu_custom_call.1} parent=43 // pred_region
          %302 = dma.done [#allocation3], 4352
        $region48: #{tpu_custom_call.1} parent=43 // pred_fallthru
          _
        %p303 = scmp.lt.s32.totalorder %s21, 3
        %s304 = scalar_select %p303, %s21, 3
        %s305 = smul.addr %s304, 8
        %s306 = scalar_lea.vmem %s0, %s305
        %p307 = pneg %p42
        %p308 = pneg %p39
        %p309 = scmp.lt.s32.totalorder %s21, 3
        %s310 = scalar_select %p309, %s21, 3
        %s311 = smul.addr %s310, 8
        %s312 = scalar_lea.vmem %s1, %s311
        %p313 = pneg %p68
        %p314 = pneg %p65
        %p315 = pneg %p89
        %p316 = pneg %p86
        %p317 = scmp.lt.s32.totalorder %s21, 0
        %s318 = ssub.s32 0, %s21
        %s319 = scalar_select %p317, %s318, %s21
        %s320 = sand.u32 %s319, 1
        %s321 = ssub.s32 0, %s320
        %s322 = scalar_select %p317, %s321, %s320
        %p323 = scmp.ne.s32.totalorder %s322, 0
        %p324 = scmp.lt.s32.totalorder %s322, 0
        %p325 = pnand %p324, %p323
        %p326 = pneg %p325
        %s327 = sadd.s32 %s322, 2
        %s328 = scalar_select %p326, %s327, %s322
        %p329 = scmp.lt.s32.totalorder %s328, 7
        %s330 = scalar_select %p329, %s328, 7
        %s331 = smul.addr %s330, 8
        %s332 = scalar_lea.vmem %s3, %s331
        %p333 = pneg %p139
        %p334 = pneg %p136
        %p335 = pneg %p160
        %p336 = pneg %p157
        %p337 = pneg %p181
        %p338 = pneg %p178
        %p339 = pneg %p207
        %p340 = pneg %p204
        %s341 = sand.u32 %s194, 1
        %s342 = scalar_lea.sflag [#allocation4], %s341
        %s343 = sand.u32 %s194, 1
        %s344 = smul.addr %s343, 8
        %s345 = scalar_lea.vmem [#allocation5], %s344
        %p346 = scmp.lt.s32.totalorder %s21, 3
        %s347 = scalar_select %p346, %s21, 3
        %s348 = smul.addr %s347, 8
        %s349 = scalar_lea.vmem %s0, %s348
        %p350 = scmp.lt.s32.totalorder %s21, 3
        %s351 = scalar_select %p350, %s21, 3
        %s352 = smul.addr %s351, 8
        %s353 = scalar_lea.vmem %s1, %s352
        %p354 = scmp.lt.s32.totalorder %s21, 0
        %s355 = ssub.s32 0, %s21
        %s356 = scalar_select %p354, %s355, %s21
        %s357 = sand.u32 %s356, 1
        %s358 = ssub.s32 0, %s357
        %s359 = scalar_select %p354, %s358, %s357
        %p360 = scmp.ne.s32.totalorder %s359, 0
        %p361 = scmp.lt.s32.totalorder %s359, 0
        %p362 = pnand %p361, %p360
        %p363 = pneg %p362
        %s364 = sadd.s32 %s359, 2
        %s365 = scalar_select %p363, %s364, %s359
        %p366 = scmp.lt.s32.totalorder %s365, 7
        %s367 = scalar_select %p366, %s365, 7
        %s368 = smul.addr %s367, 8
        %s369 = scalar_lea.vmem %s3, %s368
        %p370 = scmp.lt.s32.totalorder %s21, 0
        %s371 = ssub.s32 0, %s21
        %s372 = scalar_select %p370, %s371, %s21
        %s373 = sand.u32 %s372, 1
        %s374 = ssub.s32 0, %s373
        %s375 = scalar_select %p370, %s374, %s373
        %p376 = scmp.ne.s32.totalorder %s375, 0
        %p377 = scmp.lt.s32.totalorder %s375, 0
        %p378 = pnand %p377, %p376
        %p379 = pneg %p378
        %s380 = sadd.s32 %s375, 2
        %s381 = scalar_select %p379, %s380, %s375
        %v382 = vld [vmem:[%s349] sm:$0xff]
        %v383 = vld [vmem:[%s353] sm:$0xff]
        %v384 = vlaneseq
        %v385 = vand.u32 %v384, 127
        %v386 = vadd.s32 %v385, 128
        %v387 = vadd.s32 %v385, 256
        %v388 = vadd.s32 %v382, 1
        %v389 = vmul.u32 %v388, 31
        %v390 = vand.u32 %v389, 63
        %391 = vset.pattern.permute.xlu0 0
        %392 = vperm.xlu0 %391, %v390
        %v393 = vpop.permute.xlu0 %392
        %vm394 = vcmp.eq.s32.totalorder %v385, %v393
        %vm395 = vcmp.eq.s32.totalorder %v386, %v393
        %vm396 = vcmp.eq.s32.totalorder %v387, %v393
        %v397 = vsel %vm394, 1, 0
        %v398 = vsel %vm395, 1, 0
        %v399 = vsel %vm396, 1, 0
        %v400 = vcvt.s32.f32 %v397
        %v401 = vcvt.s32.f32 %v398
        %v402 = vcvt.s32.f32 %v399
        %v403 = vadd.f32 %v400, 0.0
        %v404 = vadd.f32 %v401, 0.0
        %v405 = vadd.f32 %v402, 0.0
        %v406 = vmul.u32 %v388, 43
        %v407 = vand.u32 %v406, 63
        %v408 = vadd.s32 %v407, 64
        %409 = vset.pattern.permute.xlu0 0
        %410 = vperm.xlu0 %409, %v408
        %v411 = vpop.permute.xlu0 %410
        %vm412 = vcmp.eq.s32.totalorder %v385, %v411
        %vm413 = vcmp.eq.s32.totalorder %v386, %v411
        %vm414 = vcmp.eq.s32.totalorder %v387, %v411
        %v415 = vsel %vm412, 1, 0
        %v416 = vsel %vm413, 1, 0
        %v417 = vsel %vm414, 1, 0
        %v418 = vcvt.s32.f32 %v415
        %v419 = vcvt.s32.f32 %v416
        %v420 = vcvt.s32.f32 %v417
        %v421 = vadd.f32 %v403, %v418
        %v422 = vadd.f32 %v404, %v419
        %v423 = vadd.f32 %v405, %v420
        %v424 = vmul.u32 %v388, 59
        %v425 = vand.u32 %v424, 63
        %v426 = vadd.s32 %v425, 128
        %427 = vset.pattern.permute.xlu0 0
        %428 = vperm.xlu0 %427, %v426
        %v429 = vpop.permute.xlu0 %428
        %vm430 = vcmp.eq.s32.totalorder %v385, %v429
        %vm431 = vcmp.eq.s32.totalorder %v386, %v429
        %vm432 = vcmp.eq.s32.totalorder %v387, %v429
        %v433 = vsel %vm430, 1, 0
        %v434 = vsel %vm431, 1, 0
        %v435 = vsel %vm432, 1, 0
        %v436 = vcvt.s32.f32 %v433
        %v437 = vcvt.s32.f32 %v434
        %v438 = vcvt.s32.f32 %v435
        %v439 = vadd.f32 %v421, %v436
        %v440 = vadd.f32 %v422, %v437
        %v441 = vadd.f32 %v423, %v438
        %v442 = vmul.u32 %v388, 61
        %v443 = vand.u32 %v442, 63
        %v444 = vadd.s32 %v443, 192
        %445 = vset.pattern.permute.xlu0 0
        %446 = vperm.xlu0 %445, %v444
        %v447 = vpop.permute.xlu0 %446
        %vm448 = vcmp.eq.s32.totalorder %v385, %v447
        %vm449 = vcmp.eq.s32.totalorder %v386, %v447
        %vm450 = vcmp.eq.s32.totalorder %v387, %v447
        %v451 = vsel %vm448, 1, 0
        %v452 = vsel %vm449, 1, 0
        %v453 = vsel %vm450, 1, 0
        %v454 = vcvt.s32.f32 %v451
        %v455 = vcvt.s32.f32 %v452
        %v456 = vcvt.s32.f32 %v453
        %v457 = vadd.f32 %v439, %v454
        %v458 = vadd.f32 %v440, %v455
        %v459 = vadd.f32 %v441, %v456
        %v460 = vadd.s32 %v383, 256
        %461 = vset.pattern.permute.xlu0 0
        %462 = vperm.xlu0 %461, %v460
        %v463 = vpop.permute.xlu0 %462
        %vm464 = vcmp.eq.s32.totalorder %v385, %v463
        %vm465 = vcmp.eq.s32.totalorder %v386, %v463
        %vm466 = vcmp.eq.s32.totalorder %v387, %v463
        %v467 = vsel %vm464, 1, 0
        %v468 = vsel %vm465, 1, 0
        %v469 = vsel %vm466, 1, 0
        %v470 = vcvt.s32.f32 %v467
        %v471 = vcvt.s32.f32 %v468
        %v472 = vcvt.s32.f32 %v469
        %v473 = vadd.f32 %v457, %v470
        %v474 = vadd.f32 %v458, %v471
        %v475 = vadd.f32 %v459, %v472
        %v476 = vld [vmem:[#allocation2] sm:$0xff]
        %v477 = vld [vmem:[#allocation2 + $0x8] sm:$0xff]
        %v478 = vld [vmem:[#allocation2 + $0x10] sm:$0xff]
        %v479 = vld [vmem:[#allocation2 + $0x18] sm:$0xff]
        %v480 = vld [vmem:[#allocation2 + $0x20] sm:$0xff]
        %v481 = vld [vmem:[#allocation2 + $0x28] sm:$0xff]
        %v482 = vld [vmem:[#allocation2 + $0x30] sm:$0xff]
        %v483 = vld [vmem:[#allocation2 + $0x38] sm:$0xff]
        %v484 = vld [vmem:[#allocation2 + $0x40] sm:$0xff]
        %v485 = vld [vmem:[#allocation2 + $0x48] sm:$0xff]
        %v486 = vld [vmem:[#allocation2 + $0x50] sm:$0xff]
        %v487 = vld [vmem:[#allocation2 + $0x58] sm:$0xff]
        %v488 = vld [vmem:[#allocation2 + $0x60] sm:$0xff]
        %v489 = vld [vmem:[#allocation2 + $0x68] sm:$0xff]
        %v490 = vld [vmem:[#allocation2 + $0x70] sm:$0xff]
        %v491 = vld [vmem:[#allocation2 + $0x78] sm:$0xff]
        %v492 = vld [vmem:[#allocation2 + $0x80] sm:$0xff]
        %v493 = vld [vmem:[#allocation2 + $0x88] sm:$0xff]
        %v494 = vld [vmem:[#allocation2 + $0x90] sm:$0xff]
        %v495 = vld [vmem:[#allocation2 + $0x98] sm:$0xff]
        %v496 = vld [vmem:[#allocation2 + $0xa0] sm:$0xff]
        %v497 = vld [vmem:[#allocation2 + $0xa8] sm:$0xff]
        %v498 = vld [vmem:[#allocation2 + $0xb0] sm:$0xff]
        %v499 = vld [vmem:[#allocation2 + $0xb8] sm:$0xff]
        %v500 = vld [vmem:[#allocation2 + $0xc0] sm:$0xff]
        %v501 = vld [vmem:[#allocation2 + $0xc8] sm:$0xff]
        %v502 = vld [vmem:[#allocation2 + $0xd0] sm:$0xff]
        %v503 = vld [vmem:[#allocation2 + $0xd8] sm:$0xff]
        %v504 = vld [vmem:[#allocation2 + $0xe0] sm:$0xff]
        %v505 = vld [vmem:[#allocation2 + $0xe8] sm:$0xff]
        %v506 = vld [vmem:[#allocation2 + $0xf0] sm:$0xff]
        %v507 = vld [vmem:[#allocation2 + $0xf8] sm:$0xff]
        %v508 = vld [vmem:[#allocation2 + $0x100] sm:$0xff]
        %v509 = vld [vmem:[#allocation2 + $0x108] sm:$0xff]
        %v510 = vld [vmem:[%s369] sm:$0xff]
        %vm511 = vcmask 130048
        %v513 = vsel %vm511, %v475, 0
        %515 = vmatpush.msra.mxu0 %v491
        %516 = vmatpush.msra.mxu0 %v490
        %517 = vmatpush.msra.mxu0 %v489
        %518 = vmatpush.msra.mxu0 %v488
        %519 = vmatpush.msra.mxu0 %v487
        %520 = vmatpush.msra.mxu0 %v486
        %521 = vmatpush.msra.mxu0 %v485
        %522 = vmatpush.msra.mxu0 %v484
        %523 = vmatpush.msra.mxu0 %v483
        %524 = vmatpush.msra.mxu0 %v482
        %525 = vmatpush.msra.mxu0 %v481
        %526 = vmatpush.msra.mxu0 %v480
        %527 = vmatpush.msra.mxu0 %v479
        %528 = vmatpush.msra.mxu0 %v478
        %529 = vmatpush.msra.mxu0 %v477
        %530 = vmatpush.msra.mxu0 %v476
        %531 = vmatmul.f32.gmra.mxu0 %v473
        %v532 = vpop.f32.mrf.mxu0
        %v533 = vadd.f32 %v510, %v532
        %534 = vdwg.mxu0
        %535 = vmatpush.msra.mxu0 %v507
        %536 = vmatpush.msra.mxu0 %v506
        %537 = vmatpush.msra.mxu0 %v505
        %538 = vmatpush.msra.mxu0 %v504
        %539 = vmatpush.msra.mxu0 %v503
        %540 = vmatpush.msra.mxu0 %v502
        %541 = vmatpush.msra.mxu0 %v501
        %542 = vmatpush.msra.mxu0 %v500
        %543 = vmatpush.msra.mxu0 %v499
        %544 = vmatpush.msra.mxu0 %v498
        %545 = vmatpush.msra.mxu0 %v497
        %546 = vmatpush.msra.mxu0 %v496
        %547 = vmatpush.msra.mxu0 %v495
        %548 = vmatpush.msra.mxu0 %v494
        %549 = vmatpush.msra.mxu0 %v493
        %550 = vmatpush.msra.mxu0 %v492
        %551 = vmatmul.f32.gmra.mxu0 %v474
        %v552 = vpop.f32.mrf.mxu0
        %v553 = vadd.f32 %v533, %v552
        %554 = vdwg.mxu0
        %555 = vmatpush.msra.mxu0 0.0
        %556 = vmatpush.msra.mxu0 0.0
        %557 = vmatpush.msra.mxu0 0.0
        %558 = vmatpush.msra.mxu0 0.0
        %559 = vmatpush.msra.mxu0 0.0
        %560 = vmatpush.msra.mxu0 0.0
        %561 = vmatpush.msra.mxu0 0.0
        %562 = vmatpush.msra.mxu0 0.0
        %563 = vmatpush.msra.mxu0 0.0
        %564 = vmatpush.msra.mxu0 0.0
        %565 = vmatpush.msra.mxu0 0.0
        %566 = vmatpush.msra.mxu0 0.0
        %567 = vmatpush.msra.mxu0 0.0
        %568 = vmatpush.msra.mxu0 0.0
        %569 = vmatpush.msra.mxu0 %v509
        %570 = vmatpush.msra.mxu0 %v508
        %571 = vmatmul.f32.gmra.mxu0 %v513
        %v572 = vpop.f32.mrf.mxu0
        %v573 = vadd.f32 %v553, %v572
        %574 = vdwg.mxu0
        %575 = vadd.xlane.f32.xlu0 %v573
        %v576 = vpop.xlane.xlu0 %575
        %v577 = vrcp.pop 128.0
        %v578 = vmul.f32 128.0, %v577
        %v579 = vsub.f32 1.0, %v578
        %v580 = vmul.f32 %v577, %v579
        %v581 = vadd.f32 %v577, %v580
        %vm582 = vweird.f32 %v577
        %v583 = vsel %vm582, %v577, %v581
        %v584 = vmul.f32 %v576, %v583
        %v585 = vsub.f32 %v573, %v584
        %v586 = vmul.f32 %v585, %v585
        %587 = vadd.xlane.f32.xlu0 %v586
        %v588 = vpop.xlane.xlu0 %587
        %v589 = vmul.f32 %v588, %v583
        %v590 = vadd.f32 %v589, 1e-12
        %v591 = vrsqrt.pop %v590
        %v592 = vmul.f32 %v591, %v590
        %v593 = vmul.f32 %v592, %v591
        %v594 = vmul.f32 0.5, %v593
        %v595 = vsub.f32 1.5, %v594
        %v596 = vmul.f32 %v591, %v595
        %vm597 = vweird.f32 %v590
        %vm598 = vweird.f32 %v591
        %vm599 = vmor %vm597, %vm598
        %v600 = vsel %vm599, %v591, %v596
        %v601 = vmul.f32 %v585, %v600
        %v602 = vld [vmem:[%s4] sm:$0x1]
        %v604 = vperm.slane %v602, 0
        %v606 = vmul.f32 %v601, %v604
        %v607 = vld [vmem:[%s5] sm:$0x1]
        %v609 = vperm.slane %v607, 0
        %v611 = vadd.f32 %v606, %v609
        %612 = vst [vmem:[%s345] sm:$0xff] %v611
        %s613 = sand.u32 %s194, 1
        %s614 = scalar_lea.sflag [#allocation4], %s613
        %s615 = sand.u32 %s194, 1
        %s616 = smul.addr %s615, 8
        %s617 = scalar_lea.vmem [#allocation5], %s616
        // Predicated region
        $region49: #{tpu_custom_call.1} parent=43 // pred_check
          %p618 = pneg %p204
        $region50: #{tpu_custom_call.1} parent=43 // pred_check_branch
          %620 = sbr.rel (%p618) target = $region52
        $region51: #{tpu_custom_call.1} parent=43 // pred_region
          %622 = vsyncadd %s614, 0
          %s623 = smul.addr %s21, 8
          %s624 = scalar_lea.hbm %s6, %s623
          %s626 = sshll.u32 %s617, 4
          %s627 = int_to_ptr.vmem [resolvable:$true] %s626
          %s628 = sshll.u32 %s624, 4
          %s629 = int_to_ptr.hbm [resolvable:$true] %s628
          %631 = dma.vmem_to_hbm [thread:$0]  %s627, 128, %s629, %s614
        $region52: #{tpu_custom_call.1} parent=43 // pred_fallthru
          _
      $region44: #{tpu_custom_call.1} parent=5 // pred_fallthru
        _
      %p632 = scmp.le.s32.totalorder 2, %s16
      // Predicated region
      $region53: #{tpu_custom_call.1} parent=5 // pred_check
        %p633 = pneg %p632
      $region54: #{tpu_custom_call.1} parent=5 // pred_check_branch
        %635 = sbr.rel (%p633) target = $region56
      $region55: #{tpu_custom_call.1} parent=5 // pred_region
        %s636 = ssub.s32 %s16, 2
        // Predicated region
        $region57: #{tpu_custom_call.1} parent=55 // pred_check
          %p637 = pneg %p210
        $region58: #{tpu_custom_call.1} parent=55 // pred_check_branch
          %639 = sbr.rel (%p637) target = $region60
        $region59: #{tpu_custom_call.1} parent=55 // pred_region
          %s640 = sand.u32 %s195, 1
          %s641 = scalar_lea.sflag [#allocation4], %s640
          %s642 = sand.u32 %s195, 1
          %s643 = smul.addr %s642, 8
          %s644 = scalar_lea.vmem [#allocation5], %s643
          %646 = dma.done %s641, 128
        $region60: #{tpu_custom_call.1} parent=55 // pred_fallthru
          _
      $region56: #{tpu_custom_call.1} parent=5 // pred_fallthru
        _
    $region6: #{tpu_custom_call.1} parent=1 // loop_footer
      %s20 = sadd.s32 1, %s16
    $region7: #{tpu_custom_call.1} parent=1 // loop_footer_branch
      %15 = sbr.rel target = $region3
    $region8: #{tpu_custom_call.1} parent=1 // loop_exit
      _
    %647 = vsyncpa [#allocation3], 1
    %s648 = scalar_lea.sflag [#allocation3], 1
    %649 = vsyncpa %s648, 1
    %650 = vsyncpa [#allocation4], 1
    %s651 = scalar_lea.sflag [#allocation4], 1
    %652 = vsyncpa %s651, 1

</llo_original>
